<compile_context>
chip_gen: v5e
topology: v5e:2x2
jax: 0.10.0
libtpu: 0.0.40
codegen_flags: <defaults>
</compile_context>

<pallas_src>
import functools

import jax
import jax.numpy as jnp
from jax import lax
from jax.experimental import pallas as pl
from jax.experimental.pallas import tpu as pltpu


def _round_up(x, m):
    return (x + m - 1) // m * m


def _pick_tile(dim, align, cap, min_tile):
    """Largest aligned tile <= cap; prefer exact divisors of the aligned dim."""
    d = _round_up(dim, align)
    if d <= cap:
        return d
    t = (cap // align) * align
    while t >= min_tile:
        if d % t == 0:
            return t          # exact divisor -> zero padding waste
        t -= align
    return cap                # no good divisor -> pad up to cap multiples


_DOT_DIMS = (((1,), (1,)), ((), ()))  # contract last dim of x with last dim of W(N,K)


def _linear_silu_kernel_single(x_ref, w_ref, b_ref, o_ref):
    """Single K step: no accumulator scratch, fused bias + SiLU epilogue."""
    z = lax.dot_general(
        x_ref[...], w_ref[...],
        dimension_numbers=_DOT_DIMS,
        preferred_element_type=jnp.float32,
    )
    z = z + b_ref[...].astype(jnp.float32)  # (tm, tn) + (1, tn)
    o_ref[...] = (z * jax.nn.sigmoid(z)).astype(o_ref.dtype)


def _linear_silu_kernel_multi(x_ref, w_ref, b_ref, o_ref, acc_ref):
    """K-reduction over the last grid axis with a persistent f32 accumulator."""
    k = pl.program_id(2)

    @pl.when(k == 0)
    def _():
        acc_ref[...] = jnp.zeros_like(acc_ref)

    acc_ref[...] += lax.dot_general(
        x_ref[...], w_ref[...],
        dimension_numbers=_DOT_DIMS,
        preferred_element_type=jnp.float32,
    )

    @pl.when(k == pl.num_programs(2) - 1)
    def _():
        z = acc_ref[...] + b_ref[...].astype(jnp.float32)
        o_ref[...] = (z * jax.nn.sigmoid(z)).astype(o_ref.dtype)


@functools.partial(jax.jit, static_argnames=("tm", "tn", "tk"))
def linear_silu(x, weight, bias=None, *, tm=None, tn=None, tk=None):
    """silu(x @ weight.T + bias).

    x:      (..., K)
    weight: (N, K)   torch.nn.Linear convention (out_features, in_features)
    bias:   (N,) or None
    """
    orig_shape = x.shape
    K = orig_shape[-1]
    N, Kw = weight.shape
    assert Kw == K, "weight in_features must match x last dim"

    M = 1
    for d in orig_shape[:-1]:
        M *= d
    x2d = x.reshape(M, K)

    if bias is None:
        bias = jnp.zeros((N,), dtype=x.dtype)
    b2d = bias.reshape(1, N)

    # ---- shape-adaptive tile selection (MXU/lane aligned, VMEM safe) ----
    if tm is None:
        tm = _pick_tile(M, 8, 256, 64)       # sublane-aligned
    if tn is None:
        tn = _pick_tile(N, 128, 512, 128)    # lane-dense output
    if tk is None:
        tk = _pick_tile(K, 128, 1024, 256)   # big K block / single step if K small

    # ---- pad ragged shapes up to tile multiples (instead of tiny tiles) ----
    Mp, Np, Kp = _round_up(M, tm), _round_up(N, tn), _round_up(K, tk)
    if (Mp, Kp) != (M, K):
        x2d = jnp.pad(x2d, ((0, Mp - M), (0, Kp - K)))
    w = weight
    if (Np, Kp) != (N, K):
        w = jnp.pad(weight, ((0, Np - N), (0, Kp - K)))
    if Np != N:
        b2d = jnp.pad(b2d, ((0, 0), (0, Np - N)))

    nm, nn, nk = Mp // tm, Np // tn, Kp // tk

    itemsize = jnp.dtype(x.dtype).itemsize
    cost = pl.CostEstimate(
        flops=2 * M * N * K,
        transcendentals=M * N,
        bytes_accessed=(M * K + N * K + N + M * N) * itemsize,
    )

    if nk == 1:
        # --------- single-K-step kernel: no accumulator scratch ---------
        if nm >= nn:  # larger extent leads -> both v7x TCs busy
            grid = (nm, nn)
            x_map = lambda i, j: (i, 0)
            w_map = lambda i, j: (j, 0)
            b_map = lambda i, j: (0, j)
            o_map = lambda i, j: (i, j)
        else:
            grid = (nn, nm)
            x_map = lambda j, i: (i, 0)
            w_map = lambda j, i: (j, 0)
            b_map = lambda j, i: (0, j)
            o_map = lambda j, i: (i, j)

        out = pl.pallas_call(
            _linear_silu_kernel_single,
            out_shape=jax.ShapeDtypeStruct((Mp, Np), x.dtype),
            grid_spec=pltpu.PrefetchScalarGridSpec(
                num_scalar_prefetch=0,
                grid=grid,
                in_specs=[
                    pl.BlockSpec((tm, tk), x_map),   # x tile (tm, K)
                    pl.BlockSpec((tn, tk), w_map),   # W tile (tn, K), torch layout
                    pl.BlockSpec((1, tn), b_map),    # bias tile
                ],
                out_specs=pl.BlockSpec((tm, tn), o_map),
            ),
            compiler_params=pltpu.CompilerParams(
                dimension_semantics=("parallel", "parallel")
            ),
            cost_estimate=cost,
        )(x2d, w, b2d)
    else:
        # --------- K-reduction kernel with f32 accumulator scratch ---------
        if nm >= nn:
            grid = (nm, nn, nk)
            x_map = lambda i, j, k: (i, k)
            w_map = lambda i, j, k: (j, k)
            b_map = lambda i, j, k: (0, j)
            o_map = lambda i, j, k: (i, j)
        else:
            grid = (nn, nm, nk)
            x_map = lambda j, i, k: (i, k)
            w_map = lambda j, i, k: (j, k)
            b_map = lambda j, i, k: (0, j)
            o_map = lambda j, i, k: (i, j)

        out = pl.pallas_call(
            _linear_silu_kernel_multi,
            out_shape=jax.ShapeDtypeStruct((Mp, Np), x.dtype),
            grid_spec=pltpu.PrefetchScalarGridSpec(
                num_scalar_prefetch=0,
                grid=grid,
                in_specs=[
                    pl.BlockSpec((tm, tk), x_map),
                    pl.BlockSpec((tk, tn), lambda *a: None) if False else pl.BlockSpec((tn, tk), w_map),
                    pl.BlockSpec((1, tn), b_map),
                ],
                out_specs=pl.BlockSpec((tm, tn), o_map),
                scratch_shapes=[pltpu.VMEM((tm, tn), jnp.float32)],
            ),
            compiler_params=pltpu.CompilerParams(
                dimension_semantics=("parallel", "parallel", "arbitrary")
            ),
            cost_estimate=cost,
        )(x2d, w, b2d)

    if (Mp, Np) != (M, N):
        out = out[:M, :N]
    return out.reshape(*orig_shape[:-1], N)


if __name__ == "__main__":
    # Small, deterministic synthetic problem:
    #   batch=2, seq=8, in_features=256, out_features=256  (M = 16)
    batch, seq, in_features, out_features = 2, 8, 256, 256

    key = jax.random.PRNGKey(0)
    kx, kw, kb = jax.random.split(key, 3)

    x = jax.random.normal(kx, (batch, seq, in_features), dtype=jnp.float32)
    # nn.Linear-style init (deterministic, not a checkpoint load)
    bound = 1.0 / (in_features ** 0.5)
    weight = jax.random.uniform(
        kw, (out_features, in_features), minval=-bound, maxval=bound,
        dtype=jnp.float32)
    bias = jax.random.uniform(
        kb, (out_features,), minval=-bound, maxval=bound, dtype=jnp.float32)

    y = linear_silu(x, weight, bias)
    jax.block_until_ready(y)

    # Reference check in plain JAX
    z_ref = x @ weight.T + bias
    y_ref = z_ref * jax.nn.sigmoid(z_ref)
    assert y.shape == (batch, seq, out_features)
    assert jnp.allclose(y, y_ref, atol=1e-5, rtol=1e-5), "mismatch vs reference"

    # Also exercise the multi-K / non-divisible path
    # (K=1536 -> tk=768, 2 K-steps; N=640 -> tn=128, no padding; M=200 -> tm=200)
    M2, K2, N2 = 200, 1536, 640
    x2 = jax.random.normal(jax.random.PRNGKey(1), (M2, K2), dtype=jnp.float32)
    w2 = jax.random.normal(jax.random.PRNGKey(2), (N2, K2), dtype=jnp.float32) * 0.02
    b2 = jax.random.normal(jax.random.PRNGKey(3), (N2,), dtype=jnp.float32)
    y2 = linear_silu(x2, w2, b2)
    jax.block_until_ready(y2)
    z2_ref = x2 @ w2.T + b2
    y2_ref = z2_ref * jax.nn.sigmoid(z2_ref)
    assert jnp.allclose(y2, y2_ref, atol=1e-3, rtol=1e-3), "mismatch vs reference (multi-K)"

    print("KERNEL_OK")
</pallas_src>

<mosaic_0001>
module attributes {stable_mosaic.version = 11 : i64} {
  func.func @_linear_silu_kernel_single(%arg0: i32, %arg1: i32, %arg2: memref<16x256xf32, #tpu.memory_space<vmem>>, %arg3: memref<256x256xf32, #tpu.memory_space<vmem>>, %arg4: memref<1x256xf32, #tpu.memory_space<vmem>>, %arg5: memref<16x256xf32, #tpu.memory_space<vmem>>) attributes {dimension_semantics = [#tpu.dimension_semantics<parallel>, #tpu.dimension_semantics<parallel>], iteration_bounds = array<i64: 1, 1>, scalar_prefetch = 0 : i64, scratch_operands = 0 : i64, tpu.core_type = #tpu.core_type<tc>, window_params = [{transform_indices = @transform_0, window_bounds = array<i64: 16, 256>}, {transform_indices = @transform_1, window_bounds = array<i64: 256, 256>}, {transform_indices = @transform_2, window_bounds = array<i64: 1, 256>}, {transform_indices = @transform_3, window_bounds = array<i64: 16, 256>}]} {
    %c0 = arith.constant 0 : index
    %c0_0 = arith.constant 0 : index
    %0 = vector.load %arg2[%c0, %c0_0] : memref<16x256xf32, #tpu.memory_space<vmem>>, vector<16x256xf32>
    %c0_1 = arith.constant 0 : index
    %c0_2 = arith.constant 0 : index
    %1 = vector.load %arg3[%c0_1, %c0_2] : memref<256x256xf32, #tpu.memory_space<vmem>>, vector<256x256xf32>
    %cst = arith.constant dense<0.000000e+00> : vector<16x256xf32>
    %2 = tpu.matmul %0, %1, %cst {dimension_numbers = #tpu.dot_dimension_numbers<[1], [1], [0], [0], [0, 0, 1, 0], [], []>} : vector<16x256xf32>, vector<256x256xf32>, vector<16x256xf32> -> vector<16x256xf32>
    %c0_3 = arith.constant 0 : index
    %c0_4 = arith.constant 0 : index
    %3 = vector.load %arg4[%c0_3, %c0_4] : memref<1x256xf32, #tpu.memory_space<vmem>>, vector<1x256xf32>
    %4 = vector.broadcast %3 : vector<1x256xf32> to vector<16x256xf32>
    %5 = arith.addf %2, %4 : vector<16x256xf32>
    %6 = arith.negf %5 : vector<16x256xf32>
    %7 = math.exp %6 : vector<16x256xf32>
    %cst_5 = arith.constant 1.000000e+00 : f32
    %8 = vector.broadcast %cst_5 : f32 to vector<16x256xf32>
    %9 = arith.addf %8, %7 : vector<16x256xf32>
    %10 = arith.divf %8, %9 : vector<16x256xf32>
    %11 = arith.mulf %5, %10 : vector<16x256xf32>
    %c0_6 = arith.constant 0 : index
    %c0_7 = arith.constant 0 : index
    %12 = vector.load %arg5[%c0_6, %c0_7] : memref<16x256xf32, #tpu.memory_space<vmem>>, vector<16x256xf32>
    tpu.vector_store %arg5[%c0_6, %c0_7], %11 {strides = array<i32>} : memref<16x256xf32, #tpu.memory_space<vmem>>, vector<16x256xf32>,
    return
  }
  func.func @transform_0(%arg0: i32, %arg1: i32) -> (i32, i32) {
    %c0_i32 = arith.constant 0 : i32
    %c0_i32_0 = arith.constant 0 : i32
    return %arg0, %c0_i32 : i32, i32
  }
  func.func @transform_1(%arg0: i32, %arg1: i32) -> (i32, i32) {
    %c0_i32 = arith.constant 0 : i32
    %c0_i32_0 = arith.constant 0 : i32
    return %arg1, %c0_i32 : i32, i32
  }
  func.func @transform_2(%arg0: i32, %arg1: i32) -> (i32, i32) {
    %c0_i32 = arith.constant 0 : i32
    %c0_i32_0 = arith.constant 0 : i32
    return %c0_i32, %arg1 : i32, i32
  }
  func.func @transform_3(%arg0: i32, %arg1: i32) -> (i32, i32) {
    %c0_i32 = arith.constant 0 : i32
    return %arg0, %arg1 : i32, i32
  }
}

</mosaic_0001>

<llo_original>
// kernel: linear_silu.1
$region0: #{linear_silu.1}
  #allocation0 [shape = 'u32[]', space=smem, size = 0x4, offset = 0x4, fixed_abs, tag = 'smem constant byte address 0x4 - core index']
  #allocation1 [shape = 'u32[72,128]{1,0:T(1,128)}', space=vmem, size = 0x9000, scoped, tag = 'internal scratch']
  %s0 = inlined_call_operand.hbm [shape: f32[16,256], index: 0, kind: input, shape index: {}]
  %s1 = inlined_call_operand.hbm [shape: f32[256,256], index: 1, kind: input, shape index: {}]
  %s2 = inlined_call_operand.vmem [shape: f32[1,256], index: 2, kind: input, shape index: {}]
  %s3 = inlined_call_operand.hbm [shape: f32[16,256], index: 3, kind: output, shape index: {}]
  %s4 = sld [smem:[#allocation0]]
  $region30: #{linear_silu.1} parent=0
    _
  %s6 = ssub.s32 1, %s4
  %s7 = scalar_select 0, %s6, %s4
  $region1: #{linear_silu.1} parent=0
    #allocation2 [shape = 'u8[16384]{0}', space=vmem, size = 0x4000, scoped, tag = 'input window, operand 0, single buffered']
    #allocation3 [shape = 's32[1]{0}', space=sflag, size = 0x4, scoped, tag = 'scoped memory for linear_silu.1']
    #allocation4 [shape = 's32[1]{0}', space=sflag, size = 0x4, scoped, tag = 'scoped memory for linear_silu.1']
    #allocation5 [shape = 'u8[262144]{0}', space=vmem, size = 0x40000, scoped, tag = 'input window, operand 1, single buffered']
    #allocation6 [shape = 's32[1]{0}', space=sflag, size = 0x4, scoped, tag = 'scoped memory for linear_silu.1']
    #allocation7 [shape = 'u8[16384]{0}', space=vmem, size = 0x4000, scoped, tag = 'output window, operand 0, single buffered']
    %8 = vsyncpa [#allocation3], 0
    %9 = vsyncpa [#allocation6], 0
    %10 = vsyncpa [#allocation4], 0
    // Predicated region
    $region2: #{linear_silu.1} parent=1 // pred_check
      _
    $region3: #{linear_silu.1} parent=1 // pred_check_branch
      %12 = sbr.rel (0) target = $region5
    $region4: #{linear_silu.1} parent=1 // pred_region
      %14 = vsyncadd [#allocation3], 0
      %s15 = sshll.u32 %s0, 4
      %s16 = int_to_ptr.hbm [resolvable:$true] %s15
      %s17 = sshll.u32 [#allocation2], 4
      %s18 = int_to_ptr.vmem [resolvable:$true] %s17
      %23 = dma.hbm_to_vmem [thread:$0]  %s16, 512, %s18, [#allocation3], 256, 256, 16
    $region5: #{linear_silu.1} parent=1 // pred_fallthru
      _
    // Predicated region
    $region6: #{linear_silu.1} parent=1 // pred_check
      _
    $region7: #{linear_silu.1} parent=1 // pred_check_branch
      %25 = sbr.rel (0) target = $region9
    $region8: #{linear_silu.1} parent=1 // pred_region
      %27 = vsyncadd [#allocation6], 0
      %s28 = sshll.u32 %s1, 4
      %s29 = int_to_ptr.hbm [resolvable:$true] %s28
      %s30 = sshll.u32 [#allocation5], 4
      %s31 = int_to_ptr.vmem [resolvable:$true] %s30
      %36 = dma.hbm_to_vmem [thread:$0]  %s29, 8192, %s31, [#allocation6], 256, 256, 16
    $region9: #{linear_silu.1} parent=1 // pred_fallthru
      _
    // Predicated region
    $region10: #{linear_silu.1} parent=1 // pred_check
      _
    $region11: #{linear_silu.1} parent=1 // pred_check_branch
      %38 = sbr.rel (0) target = $region13
    $region12: #{linear_silu.1} parent=1 // pred_region
      _
    $region13: #{linear_silu.1} parent=1 // pred_fallthru
      _
    // Predicated region
    $region14: #{linear_silu.1} parent=1 // pred_check
      _
    $region15: #{linear_silu.1} parent=1 // pred_check_branch
      %40 = sbr.rel (0) target = $region17
    $region16: #{linear_silu.1} parent=1 // pred_region
      %42 = dma.done [#allocation3], 512
    $region17: #{linear_silu.1} parent=1 // pred_fallthru
      _
    // Predicated region
    $region18: #{linear_silu.1} parent=1 // pred_check
      _
    $region19: #{linear_silu.1} parent=1 // pred_check_branch
      %44 = sbr.rel (0) target = $region21
    $region20: #{linear_silu.1} parent=1 // pred_region
      %46 = dma.done [#allocation6], 8192
    $region21: #{linear_silu.1} parent=1 // pred_fallthru
      _
    %v47 = vld [vmem:[#allocation2] sm:$0xff]
    %v48 = vld [vmem:[#allocation2 + $0x8] sm:$0xff]
    %v49 = vld [vmem:[#allocation2 + $0x10] sm:$0xff]
    %v50 = vld [vmem:[#allocation2 + $0x18] sm:$0xff]
    %v51 = vld [vmem:[#allocation5] sm:$0xff]
    %v52 = vld [vmem:[#allocation5 + $0x8] sm:$0xff]
    %v53 = vld [vmem:[#allocation5 + $0x10] sm:$0xff]
    %v54 = vld [vmem:[#allocation5 + $0x18] sm:$0xff]
    %v55 = vld [vmem:[#allocation5 + $0x20] sm:$0xff]
    %v56 = vld [vmem:[#allocation5 + $0x28] sm:$0xff]
    %v57 = vld [vmem:[#allocation5 + $0x30] sm:$0xff]
    %v58 = vld [vmem:[#allocation5 + $0x38] sm:$0xff]
    %v59 = vld [vmem:[#allocation5 + $0x40] sm:$0xff]
    %v60 = vld [vmem:[#allocation5 + $0x48] sm:$0xff]
    %v61 = vld [vmem:[#allocation5 + $0x50] sm:$0xff]
    %v62 = vld [vmem:[#allocation5 + $0x58] sm:$0xff]
    %v63 = vld [vmem:[#allocation5 + $0x60] sm:$0xff]
    %v64 = vld [vmem:[#allocation5 + $0x68] sm:$0xff]
    %v65 = vld [vmem:[#allocation5 + $0x70] sm:$0xff]
    %v66 = vld [vmem:[#allocation5 + $0x78] sm:$0xff]
    %v67 = vld [vmem:[#allocation5 + $0x80] sm:$0xff]
    %v68 = vld [vmem:[#allocation5 + $0x88] sm:$0xff]
    %v69 = vld [vmem:[#allocation5 + $0x90] sm:$0xff]
    %v70 = vld [vmem:[#allocation5 + $0x98] sm:$0xff]
    %v71 = vld [vmem:[#allocation5 + $0xa0] sm:$0xff]
    %v72 = vld [vmem:[#allocation5 + $0xa8] sm:$0xff]
    %v73 = vld [vmem:[#allocation5 + $0xb0] sm:$0xff]
    %v74 = vld [vmem:[#allocation5 + $0xb8] sm:$0xff]
    %v75 = vld [vmem:[#allocation5 + $0xc0] sm:$0xff]
    %v76 = vld [vmem:[#allocation5 + $0xc8] sm:$0xff]
    %v77 = vld [vmem:[#allocation5 + $0xd0] sm:$0xff]
    %v78 = vld [vmem:[#allocation5 + $0xd8] sm:$0xff]
    %v79 = vld [vmem:[#allocation5 + $0xe0] sm:$0xff]
    %v80 = vld [vmem:[#allocation5 + $0xe8] sm:$0xff]
    %v81 = vld [vmem:[#allocation5 + $0xf0] sm:$0xff]
    %v82 = vld [vmem:[#allocation5 + $0xf8] sm:$0xff]
    %v83 = vld [vmem:[#allocation5 + $0x100] sm:$0xff]
    %v84 = vld [vmem:[#allocation5 + $0x108] sm:$0xff]
    %v85 = vld [vmem:[#allocation5 + $0x110] sm:$0xff]
    %v86 = vld [vmem:[#allocation5 + $0x118] sm:$0xff]
    %v87 = vld [vmem:[#allocation5 + $0x120] sm:$0xff]
    %v88 = vld [vmem:[#allocation5 + $0x128] sm:$0xff]
    %v89 = vld [vmem:[#allocation5 + $0x130] sm:$0xff]
    %v90 = vld [vmem:[#allocation5 + $0x138] sm:$0xff]
    %v91 = vld [vmem:[#allocation5 + $0x140] sm:$0xff]
    %v92 = vld [vmem:[#allocation5 + $0x148] sm:$0xff]
    %v93 = vld [vmem:[#allocation5 + $0x150] sm:$0xff]
    %v94 = vld [vmem:[#allocation5 + $0x158] sm:$0xff]
    %v95 = vld [vmem:[#allocation5 + $0x160] sm:$0xff]
    %v96 = vld [vmem:[#allocation5 + $0x168] sm:$0xff]
    %v97 = vld [vmem:[#allocation5 + $0x170] sm:$0xff]
    %v98 = vld [vmem:[#allocation5 + $0x178] sm:$0xff]
    %v99 = vld [vmem:[#allocation5 + $0x180] sm:$0xff]
    %v100 = vld [vmem:[#allocation5 + $0x188] sm:$0xff]
    %v101 = vld [vmem:[#allocation5 + $0x190] sm:$0xff]
    %v102 = vld [vmem:[#allocation5 + $0x198] sm:$0xff]
    %v103 = vld [vmem:[#allocation5 + $0x1a0] sm:$0xff]
    %v104 = vld [vmem:[#allocation5 + $0x1a8] sm:$0xff]
    %v105 = vld [vmem:[#allocation5 + $0x1b0] sm:$0xff]
    %v106 = vld [vmem:[#allocation5 + $0x1b8] sm:$0xff]
    %v107 = vld [vmem:[#allocation5 + $0x1c0] sm:$0xff]
    %v108 = vld [vmem:[#allocation5 + $0x1c8] sm:$0xff]
    %v109 = vld [vmem:[#allocation5 + $0x1d0] sm:$0xff]
    %v110 = vld [vmem:[#allocation5 + $0x1d8] sm:$0xff]
    %v111 = vld [vmem:[#allocation5 + $0x1e0] sm:$0xff]
    %v112 = vld [vmem:[#allocation5 + $0x1e8] sm:$0xff]
    %v113 = vld [vmem:[#allocation5 + $0x1f0] sm:$0xff]
    %v114 = vld [vmem:[#allocation5 + $0x1f8] sm:$0xff]
    %v115 = vld [vmem:[%s2] sm:$0x3]
    %v117 = vperm.slane %v115, 0
    %v118 = vperm.slane %v115, 1
    %121 = vmatpush.xpose.msra.mxu0 %v81
    %122 = vmatpush.xpose.msra.mxu0 %v79
    %123 = vmatpush.xpose.msra.mxu0 %v77
    %124 = vmatpush.xpose.msra.mxu0 %v75
    %125 = vmatpush.xpose.msra.mxu0 %v73
    %126 = vmatpush.xpose.msra.mxu0 %v71
    %127 = vmatpush.xpose.msra.mxu0 %v69
    %128 = vmatpush.xpose.msra.mxu0 %v67
    %129 = vmatpush.xpose.msra.mxu0 %v65
    %130 = vmatpush.xpose.msra.mxu0 %v63
    %131 = vmatpush.xpose.msra.mxu0 %v61
    %132 = vmatpush.xpose.msra.mxu0 %v59
    %133 = vmatpush.xpose.msra.mxu0 %v57
    %134 = vmatpush.xpose.msra.mxu0 %v55
    %135 = vmatpush.xpose.msra.mxu0 %v53
    %136 = vmatpush.xpose.msra.mxu0 %v51
    %137 = vmatmul.f32.gmra.mxu0 %v47
    %v138 = vpop.f32.mrf.mxu0
    %v139 = vadd.f32 %v117, %v138
    %140 = vmatmul.f32.gmra.mxu0 %v49
    %v141 = vpop.f32.mrf.mxu0
    %v142 = vadd.f32 %v117, %v141
    %143 = vdwg.mxu0
    %144 = vmatpush.xpose.msra.mxu0 %v82
    %145 = vmatpush.xpose.msra.mxu0 %v80
    %146 = vmatpush.xpose.msra.mxu0 %v78
    %147 = vmatpush.xpose.msra.mxu0 %v76
    %148 = vmatpush.xpose.msra.mxu0 %v74
    %149 = vmatpush.xpose.msra.mxu0 %v72
    %150 = vmatpush.xpose.msra.mxu0 %v70
    %151 = vmatpush.xpose.msra.mxu0 %v68
    %152 = vmatpush.xpose.msra.mxu0 %v66
    %153 = vmatpush.xpose.msra.mxu0 %v64
    %154 = vmatpush.xpose.msra.mxu0 %v62
    %155 = vmatpush.xpose.msra.mxu0 %v60
    %156 = vmatpush.xpose.msra.mxu0 %v58
    %157 = vmatpush.xpose.msra.mxu0 %v56
    %158 = vmatpush.xpose.msra.mxu0 %v54
    %159 = vmatpush.xpose.msra.mxu0 %v52
    %160 = vmatmul.f32.gmra.mxu0 %v48
    %v161 = vpop.f32.mrf.mxu0
    %v162 = vadd.f32 %v139, %v161
    %163 = vmatmul.f32.gmra.mxu0 %v50
    %v164 = vpop.f32.mrf.mxu0
    %v165 = vadd.f32 %v142, %v164
    %166 = vdwg.mxu0
    %167 = vmatpush.xpose.msra.mxu0 %v113
    %168 = vmatpush.xpose.msra.mxu0 %v111
    %169 = vmatpush.xpose.msra.mxu0 %v109
    %170 = vmatpush.xpose.msra.mxu0 %v107
    %171 = vmatpush.xpose.msra.mxu0 %v105
    %172 = vmatpush.xpose.msra.mxu0 %v103
    %173 = vmatpush.xpose.msra.mxu0 %v101
    %174 = vmatpush.xpose.msra.mxu0 %v99
    %175 = vmatpush.xpose.msra.mxu0 %v97
    %176 = vmatpush.xpose.msra.mxu0 %v95
    %177 = vmatpush.xpose.msra.mxu0 %v93
    %178 = vmatpush.xpose.msra.mxu0 %v91
    %179 = vmatpush.xpose.msra.mxu0 %v89
    %180 = vmatpush.xpose.msra.mxu0 %v87
    %181 = vmatpush.xpose.msra.mxu0 %v85
    %182 = vmatpush.xpose.msra.mxu0 %v83
    %183 = vmatmul.f32.gmra.mxu0 %v47
    %v184 = vpop.f32.mrf.mxu0
    %v185 = vadd.f32 %v118, %v184
    %186 = vmatmul.f32.gmra.mxu0 %v49
    %v187 = vpop.f32.mrf.mxu0
    %v188 = vadd.f32 %v118, %v187
    %189 = vdwg.mxu0
    %190 = vmatpush.xpose.msra.mxu0 %v114
    %191 = vmatpush.xpose.msra.mxu0 %v112
    %192 = vmatpush.xpose.msra.mxu0 %v110
    %193 = vmatpush.xpose.msra.mxu0 %v108
    %194 = vmatpush.xpose.msra.mxu0 %v106
    %195 = vmatpush.xpose.msra.mxu0 %v104
    %196 = vmatpush.xpose.msra.mxu0 %v102
    %197 = vmatpush.xpose.msra.mxu0 %v100
    %198 = vmatpush.xpose.msra.mxu0 %v98
    %199 = vmatpush.xpose.msra.mxu0 %v96
    %200 = vmatpush.xpose.msra.mxu0 %v94
    %201 = vmatpush.xpose.msra.mxu0 %v92
    %202 = vmatpush.xpose.msra.mxu0 %v90
    %203 = vmatpush.xpose.msra.mxu0 %v88
    %204 = vmatpush.xpose.msra.mxu0 %v86
    %205 = vmatpush.xpose.msra.mxu0 %v84
    %206 = vmatmul.f32.gmra.mxu0 %v48
    %v207 = vpop.f32.mrf.mxu0
    %v208 = vadd.f32 %v185, %v207
    %209 = vmatmul.f32.gmra.mxu0 %v50
    %v210 = vpop.f32.mrf.mxu0
    %v211 = vadd.f32 %v188, %v210
    %212 = vdwg.mxu0
    %v213 = vxor.u32 %v162, 2147483648
    %v214 = vxor.u32 %v208, 2147483648
    %v215 = vxor.u32 %v165, 2147483648
    %v216 = vxor.u32 %v211, 2147483648
    %v217 = vmul.f32 %v213, 1.442695
    %v218 = vpow.pop %v217
    %v219 = vmul.f32 %v214, 1.442695
    %v220 = vpow.pop %v219
    %v221 = vmul.f32 %v215, 1.442695
    %v222 = vpow.pop %v221
    %v223 = vmul.f32 %v216, 1.442695
    %v224 = vpow.pop %v223
    %v225 = vadd.f32 %v218, 1.0
    %v226 = vadd.f32 %v220, 1.0
    %v227 = vadd.f32 %v222, 1.0
    %v228 = vadd.f32 %v224, 1.0
    %v229 = vrcp.pop %v225
    %v230 = vmul.f32 %v225, %v229
    %v231 = vsub.f32 1.0, %v230
    %v232 = vmul.f32 %v229, %v231
    %v233 = vadd.f32 %v229, %v232
    %vm234 = vweird.f32 %v225
    %vm235 = vweird.f32 %v229
    %vm236 = vmor %vm234, %vm235
    %v237 = vsel %vm236, %v229, %v233
    %v238 = vand.u32 2147483647, %v225
    %vm239 = vcmp.eq.f32.partialorder %v238, 8.507059e+37
    %v240 = vand.u32 %v225, 2147483648
    %v241 = vor.u32 1.1754944e-38, %v240
    %v242 = vsel %vm239, %v241, %v237
    %v243 = vmul.f32 1.0, %v242
    %v244 = vrcp.pop %v226
    %v245 = vmul.f32 %v226, %v244
    %v246 = vsub.f32 1.0, %v245
    %v247 = vmul.f32 %v244, %v246
    %v248 = vadd.f32 %v244, %v247
    %vm249 = vweird.f32 %v226
    %vm250 = vweird.f32 %v244
    %vm251 = vmor %vm249, %vm250
    %v252 = vsel %vm251, %v244, %v248
    %v253 = vand.u32 2147483647, %v226
    %vm254 = vcmp.eq.f32.partialorder %v253, 8.507059e+37
    %v255 = vand.u32 %v226, 2147483648
    %v256 = vor.u32 1.1754944e-38, %v255
    %v257 = vsel %vm254, %v256, %v252
    %v258 = vmul.f32 1.0, %v257
    %v259 = vrcp.pop %v227
    %v260 = vmul.f32 %v227, %v259
    %v261 = vsub.f32 1.0, %v260
    %v262 = vmul.f32 %v259, %v261
    %v263 = vadd.f32 %v259, %v262
    %vm264 = vweird.f32 %v227
    %vm265 = vweird.f32 %v259
    %vm266 = vmor %vm264, %vm265
    %v267 = vsel %vm266, %v259, %v263
    %v268 = vand.u32 2147483647, %v227
    %vm269 = vcmp.eq.f32.partialorder %v268, 8.507059e+37
    %v270 = vand.u32 %v227, 2147483648
    %v271 = vor.u32 1.1754944e-38, %v270
    %v272 = vsel %vm269, %v271, %v267
    %v273 = vmul.f32 1.0, %v272
    %v274 = vrcp.pop %v228
    %v275 = vmul.f32 %v228, %v274
    %v276 = vsub.f32 1.0, %v275
    %v277 = vmul.f32 %v274, %v276
    %v278 = vadd.f32 %v274, %v277
    %vm279 = vweird.f32 %v228
    %vm280 = vweird.f32 %v274
    %vm281 = vmor %vm279, %vm280
    %v282 = vsel %vm281, %v274, %v278
    %v283 = vand.u32 2147483647, %v228
    %vm284 = vcmp.eq.f32.partialorder %v283, 8.507059e+37
    %v285 = vand.u32 %v228, 2147483648
    %v286 = vor.u32 1.1754944e-38, %v285
    %v287 = vsel %vm284, %v286, %v282
    %v288 = vmul.f32 1.0, %v287
    %v289 = vmul.f32 %v162, %v243
    %v290 = vmul.f32 %v208, %v258
    %v291 = vmul.f32 %v165, %v273
    %v292 = vmul.f32 %v211, %v288
    %293 = vst [vmem:[#allocation7] sm:$0xff] %v289
    %294 = vst [vmem:[#allocation7 + $0x8] sm:$0xff] %v290
    %295 = vst [vmem:[#allocation7 + $0x10] sm:$0xff] %v291
    %296 = vst [vmem:[#allocation7 + $0x18] sm:$0xff] %v292
    // Predicated region
    $region22: #{linear_silu.1} parent=1 // pred_check
      _
    $region23: #{linear_silu.1} parent=1 // pred_check_branch
      %298 = sbr.rel (0) target = $region25
    $region24: #{linear_silu.1} parent=1 // pred_region
      %300 = vsyncadd [#allocation4], 0
      %s301 = sshll.u32 [#allocation7], 4
      %s302 = int_to_ptr.vmem [resolvable:$true] %s301
      %s303 = sshll.u32 %s3, 4
      %s304 = int_to_ptr.hbm [resolvable:$true] %s303
      %309 = dma.vmem_to_hbm [thread:$0]  %s302, 512, %s304, [#allocation4], 256, 256, 16
    $region25: #{linear_silu.1} parent=1 // pred_fallthru
      _
    // Predicated region
    $region26: #{linear_silu.1} parent=1 // pred_check
      _
    $region27: #{linear_silu.1} parent=1 // pred_check_branch
      %311 = sbr.rel (0) target = $region29
    $region28: #{linear_silu.1} parent=1 // pred_region
      %313 = dma.done [#allocation4], 512
    $region29: #{linear_silu.1} parent=1 // pred_fallthru
      _
    %314 = vsyncpa [#allocation3], 1
    %315 = vsyncpa [#allocation6], 1
    %316 = vsyncpa [#allocation4], 1

</llo_original>
